<compile_context>
chip_gen: v5e
topology: v5e:2x2
jax: 0.10.0
libtpu: 0.0.40
codegen_flags: <defaults>
</compile_context>

<pallas_src>
import jax
import jax.numpy as jnp
from jax.experimental import pallas as pl
from jax.experimental.pallas import tpu as pltpu


def final_layer_kernel(shift_ref, scale_ref, x_ref, wl_ref, bl_ref, o_ref):
    # Blocks: shift/scale (1, 1, H); x (1, tT, H); wl (H, O); bl (1, O); o (1, tT, O)
    x = x_ref[0]                                           # (tT, H), storage dtype
    xf = x.astype(jnp.float32)

    # --- LayerNorm stats (single pass over x, f32, eps=1e-6, no affine) ---
    mean = jnp.mean(xf, axis=-1, keepdims=True)            # (tT, 1)
    mean_sq = jnp.mean(xf * xf, axis=-1, keepdims=True)    # (tT, 1)
    var = jnp.maximum(mean_sq - mean * mean, 0.0)
    inv = jax.lax.rsqrt(var + 1e-6)                        # EUP (free slot)

    # --- fused normalize + modulate:  xn*(1+scale)+shift  ==  x*gain + bias ---
    scale = scale_ref[0].astype(jnp.float32)               # (1, H)
    shift = shift_ref[0].astype(jnp.float32)               # (1, H)
    gain = inv * (1.0 + scale)                             # (tT, H)
    bias = shift - mean * gain                             # (tT, H)
    xm = (xf * gain + bias).astype(x_ref.dtype)            # keep MXU operands in storage dtype

    # --- final projection (MXU), f32 accumulation ---
    out = jnp.dot(xm, wl_ref[...], preferred_element_type=jnp.float32)
    out = out + bl_ref[...].astype(jnp.float32)
    # TODO(synk): if profiling shows masked vst.msk stores binding for very
    # narrow O (<128 lanes), reshape wrapper-side to a lane-dense output slab.
    o_ref[0] = out.astype(o_ref.dtype)


def _pick_token_tile(T, target=512):
    """Largest tile <= target that divides T (prefer multiples of 8)."""
    if T <= target:
        return T
    for cand in range(target, 0, -1):
        if T % cand == 0 and cand % 8 == 0:
            return cand
    for cand in range(target, 0, -1):
        if T % cand == 0:
            return cand
    return T


def final_layer(x, c, w_ada, b_ada, w_lin, b_lin, *, token_tile=512):
    B, T, H = x.shape
    O = w_lin.shape[1]
    tT = _pick_token_tile(T, token_tile)
    nT = T // tT

    # --- adaLN modulation hoisted out of the hot loop (tiny: B x H x 2H) ---
    cf = c.astype(jnp.float32)
    silu_c = cf * jax.nn.sigmoid(cf)
    mod = silu_c @ w_ada.astype(jnp.float32) + b_ada.astype(jnp.float32)
    shift = mod[:, :H].reshape(B, 1, H)
    scale = mod[:, H:].reshape(B, 1, H)

    bl2 = b_lin.reshape(1, O)

    x_item = jnp.dtype(x.dtype).itemsize
    w_item = jnp.dtype(w_lin.dtype).itemsize
    # Double-buffered x and out tiles + resident W_lin / biases / shift / scale.
    vmem_bytes = (2 * tT * H * x_item + 2 * tT * O * x_item
                  + H * O * w_item + O * 4 + 2 * H * 4)
    vmem_limit = int(min(max(3 * vmem_bytes, 32 << 20), 64 << 20))

    cost = pl.CostEstimate(
        flops=2 * B * T * H * O + 6 * B * T * H,
        transcendentals=B * T,
        bytes_accessed=(B * T * H * x_item + B * T * O * x_item + H * O * w_item),
    )

    return pl.pallas_call(
        final_layer_kernel,
        out_shape=jax.ShapeDtypeStruct((B, T, O), x.dtype),
        grid_spec=pltpu.PrefetchScalarGridSpec(
            num_scalar_prefetch=0,
            grid=(B, nT),
            in_specs=[
                pl.BlockSpec((1, 1, H), lambda b, t: (b, 0, 0)),    # shift (per batch)
                pl.BlockSpec((1, 1, H), lambda b, t: (b, 0, 0)),    # scale (per batch)
                pl.BlockSpec((1, tT, H), lambda b, t: (b, t, 0)),   # x tile (streamed)
                pl.BlockSpec((H, O), lambda b, t: (0, 0)),          # W_lin (resident)
                pl.BlockSpec((1, O), lambda b, t: (0, 0)),          # b_lin
            ],
            out_specs=pl.BlockSpec((1, tT, O), lambda b, t: (b, t, 0)),
        ),
        compiler_params=pltpu.CompilerParams(
            dimension_semantics=("parallel", "parallel"),
            vmem_limit_bytes=vmem_limit,
        ),
        cost_estimate=cost,
    )(shift, scale, x, w_lin, bl2)


def final_layer_ref(x, c, w_ada, b_ada, w_lin, b_lin):
    """Pure-JAX reference matching the PyTorch module."""
    silu_c = c * jax.nn.sigmoid(c)
    mod = silu_c @ w_ada + b_ada
    H = x.shape[-1]
    shift, scale = mod[:, :H], mod[:, H:]
    mean = jnp.mean(x, axis=-1, keepdims=True)
    var = jnp.mean((x - mean) ** 2, axis=-1, keepdims=True)
    xn = (x - mean) / jnp.sqrt(var + 1e-6)
    xm = xn * (1.0 + scale[:, None, :]) + shift[:, None, :]
    return xm @ w_lin + b_lin


if __name__ == "__main__":
    # Small shapes consistent with the module: hidden=32, patch=2, out_channels=4.
    B, T, H = 2, 8, 32
    patch, out_ch = 2, 4
    O = patch * patch * out_ch  # 16

    key = jax.random.PRNGKey(0)
    k_x, k_c, k_wa, k_ba, k_wl, k_bl = jax.random.split(key, 6)

    x = jax.random.normal(k_x, (B, T, H), dtype=jnp.float32)
    c = jax.random.normal(k_c, (B, H), dtype=jnp.float32)

    # Deterministic synthetic parameters (stored as (in, out) so kernel does x @ W).
    w_ada = jax.random.normal(k_wa, (H, 2 * H), dtype=jnp.float32) * (1.0 / H**0.5)
    b_ada = jax.random.normal(k_ba, (2 * H,), dtype=jnp.float32) * 0.01
    w_lin = jax.random.normal(k_wl, (H, O), dtype=jnp.float32) * (1.0 / H**0.5)
    b_lin = jax.random.normal(k_bl, (O,), dtype=jnp.float32) * 0.01

    out = final_layer(x, c, w_ada, b_ada, w_lin, b_lin)
    out = jax.block_until_ready(out)

    ref = final_layer_ref(x, c, w_ada, b_ada, w_lin, b_lin)
    assert out.shape == (B, T, O)
    assert jnp.allclose(out, ref, atol=1e-4, rtol=1e-4), "mismatch vs reference"

    print("KERNEL_OK")
</pallas_src>

<mosaic_0001>
module attributes {stable_mosaic.version = 11 : i64} {
  func.func @final_layer_kernel(%arg0: i32, %arg1: i32, %arg2: memref<1x1x32xf32, #tpu.memory_space<vmem>>, %arg3: memref<1x1x32xf32, #tpu.memory_space<vmem>>, %arg4: memref<1x8x32xf32, #tpu.memory_space<vmem>>, %arg5: memref<32x16xf32, #tpu.memory_space<vmem>>, %arg6: memref<1x16xf32, #tpu.memory_space<vmem>>, %arg7: memref<1x8x16xf32, #tpu.memory_space<vmem>>) attributes {dimension_semantics = [#tpu.dimension_semantics<parallel>, #tpu.dimension_semantics<parallel>], iteration_bounds = array<i64: 2, 1>, scalar_prefetch = 0 : i64, scratch_operands = 0 : i64, tpu.core_type = #tpu.core_type<tc>, window_params = [{transform_indices = @transform_0, window_bounds = array<i64: 1, 1, 32>}, {transform_indices = @transform_1, window_bounds = array<i64: 1, 1, 32>}, {transform_indices = @transform_2, window_bounds = array<i64: 1, 8, 32>}, {pipeline_mode = #tpu.pipeline_mode<synchronous>, transform_indices = @transform_3, window_bounds = array<i64: 32, 16>}, {pipeline_mode = #tpu.pipeline_mode<synchronous>, transform_indices = @transform_4, window_bounds = array<i64: 1, 16>}, {transform_indices = @transform_5, window_bounds = array<i64: 1, 8, 16>}]} {
    %c0 = arith.constant 0 : index
    %c0_0 = arith.constant 0 : index
    %c0_1 = arith.constant 0 : index
    %0 = vector.load %arg4[%c0, %c0_0, %c0_1] : memref<1x8x32xf32, #tpu.memory_space<vmem>>, vector<1x8x32xf32>
    %1 = vector.shape_cast %0 : vector<1x8x32xf32> to vector<8x32xf32>
    %cst = arith.constant dense<0.000000e+00> : vector<8xf32>
    %2 = vector.multi_reduction <add>, %1, %cst [1] : vector<8x32xf32> to vector<8xf32>
    %3 = vector.shape_cast %2 : vector<8xf32> to vector<8x1xf32>
    %cst_2 = arith.constant 3.200000e+01 : f32
    %4 = vector.broadcast %cst_2 : f32 to vector<8x1xf32>
    %5 = arith.divf %3, %4 : vector<8x1xf32>
    %6 = arith.mulf %1, %1 : vector<8x32xf32>
    %cst_3 = arith.constant dense<0.000000e+00> : vector<8xf32>
    %7 = vector.multi_reduction <add>, %6, %cst_3 [1] : vector<8x32xf32> to vector<8xf32>
    %8 = vector.shape_cast %7 : vector<8xf32> to vector<8x1xf32>
    %cst_4 = arith.constant 3.200000e+01 : f32
    %9 = vector.broadcast %cst_4 : f32 to vector<8x1xf32>
    %10 = arith.divf %8, %9 : vector<8x1xf32>
    %11 = arith.mulf %5, %5 : vector<8x1xf32>
    %12 = arith.subf %10, %11 : vector<8x1xf32>
    %cst_5 = arith.constant 0.000000e+00 : f32
    %13 = vector.broadcast %cst_5 : f32 to vector<8x1xf32>
    %14 = arith.maximumf %12, %13 : vector<8x1xf32>
    %cst_6 = arith.constant 9.99999997E-7 : f32
    %15 = vector.broadcast %cst_6 : f32 to vector<8x1xf32>
    %16 = arith.addf %14, %15 : vector<8x1xf32>
    %17 = math.rsqrt %16 : vector<8x1xf32>
    %c0_7 = arith.constant 0 : index
    %c0_8 = arith.constant 0 : index
    %c0_9 = arith.constant 0 : index
    %18 = vector.load %arg3[%c0_7, %c0_8, %c0_9] : memref<1x1x32xf32, #tpu.memory_space<vmem>>, vector<1x1x32xf32>
    %19 = vector.shape_cast %18 : vector<1x1x32xf32> to vector<1x32xf32>
    %c0_10 = arith.constant 0 : index
    %c0_11 = arith.constant 0 : index
    %c0_12 = arith.constant 0 : index
    %20 = vector.load %arg2[%c0_10, %c0_11, %c0_12] : memref<1x1x32xf32, #tpu.memory_space<vmem>>, vector<1x1x32xf32>
    %21 = vector.shape_cast %20 : vector<1x1x32xf32> to vector<1x32xf32>
    %cst_13 = arith.constant 1.000000e+00 : f32
    %22 = vector.broadcast %cst_13 : f32 to vector<1x32xf32>
    %23 = arith.addf %22, %19 : vector<1x32xf32>
    %24 = vector.broadcast %17 : vector<8x1xf32> to vector<8x32xf32>
    %25 = vector.broadcast %23 : vector<1x32xf32> to vector<8x32xf32>
    %26 = arith.mulf %24, %25 : vector<8x32xf32>
    %27 = vector.broadcast %5 : vector<8x1xf32> to vector<8x32xf32>
    %28 = arith.mulf %27, %26 : vector<8x32xf32>
    %29 = vector.broadcast %21 : vector<1x32xf32> to vector<8x32xf32>
    %30 = arith.subf %29, %28 : vector<8x32xf32>
    %31 = arith.mulf %1, %26 : vector<8x32xf32>
    %32 = arith.addf %31, %30 : vector<8x32xf32>
    %c0_14 = arith.constant 0 : index
    %c0_15 = arith.constant 0 : index
    %33 = vector.load %arg5[%c0_14, %c0_15] : memref<32x16xf32, #tpu.memory_space<vmem>>, vector<32x16xf32>
    %cst_16 = arith.constant dense<0.000000e+00> : vector<8x16xf32>
    %34 = tpu.matmul %32, %33, %cst_16 {dimension_numbers = #tpu.dot_dimension_numbers<[1], [0], [0], [1], [0, 0, 1, 1], [], []>} : vector<8x32xf32>, vector<32x16xf32>, vector<8x16xf32> -> vector<8x16xf32>
    %c0_17 = arith.constant 0 : index
    %c0_18 = arith.constant 0 : index
    %35 = vector.load %arg6[%c0_17, %c0_18] : memref<1x16xf32, #tpu.memory_space<vmem>>, vector<1x16xf32>
    %36 = vector.broadcast %35 : vector<1x16xf32> to vector<8x16xf32>
    %37 = arith.addf %34, %36 : vector<8x16xf32>
    %c0_19 = arith.constant 0 : index
    %c0_20 = arith.constant 0 : index
    %c0_21 = arith.constant 0 : index
    %38 = vector.load %arg7[%c0_19, %c0_20, %c0_21] : memref<1x8x16xf32, #tpu.memory_space<vmem>>, vector<1x8x16xf32>
    %39 = vector.shape_cast %38 : vector<1x8x16xf32> to vector<8x16xf32>
    %40 = vector.shape_cast %37 : vector<8x16xf32> to vector<1x8x16xf32>
    tpu.vector_store %arg7[%c0_19, %c0_20, %c0_21], %40 {strides = array<i32>} : memref<1x8x16xf32, #tpu.memory_space<vmem>>, vector<1x8x16xf32>,
    return
  }
  func.func @transform_0(%arg0: i32, %arg1: i32) -> (i32, i32, i32) {
    %c0_i32 = arith.constant 0 : i32
    %c0_i32_0 = arith.constant 0 : i32
    %c0_i32_1 = arith.constant 0 : i32
    return %arg0, %c0_i32, %c0_i32_0 : i32, i32, i32
  }
  func.func @transform_1(%arg0: i32, %arg1: i32) -> (i32, i32, i32) {
    %c0_i32 = arith.constant 0 : i32
    %c0_i32_0 = arith.constant 0 : i32
    %c0_i32_1 = arith.constant 0 : i32
    return %arg0, %c0_i32, %c0_i32_0 : i32, i32, i32
  }
  func.func @transform_2(%arg0: i32, %arg1: i32) -> (i32, i32, i32) {
    %c0_i32 = arith.constant 0 : i32
    %c0_i32_0 = arith.constant 0 : i32
    return %arg0, %arg1, %c0_i32 : i32, i32, i32
  }
  func.func @transform_3(%arg0: i32, %arg1: i32) -> (i32, i32) {
    %c0_i32 = arith.constant 0 : i32
    %c0_i32_0 = arith.constant 0 : i32
    %c0_i32_1 = arith.constant 0 : i32
    return %c0_i32, %c0_i32_0 : i32, i32
  }
  func.func @transform_4(%arg0: i32, %arg1: i32) -> (i32, i32) {
    %c0_i32 = arith.constant 0 : i32
    %c0_i32_0 = arith.constant 0 : i32
    %c0_i32_1 = arith.constant 0 : i32
    return %c0_i32, %c0_i32_0 : i32, i32
  }
  func.func @transform_5(%arg0: i32, %arg1: i32) -> (i32, i32, i32) {
    %c0_i32 = arith.constant 0 : i32
    %c0_i32_0 = arith.constant 0 : i32
    return %arg0, %arg1, %c0_i32 : i32, i32, i32
  }
}

</mosaic_0001>

<llo_original>
// kernel: tpu_custom_call.1
$region0: #{tpu_custom_call.1}
  #allocation0 [shape = 'u32[]', space=smem, size = 0x4, offset = 0x4, fixed_abs, tag = 'smem constant byte address 0x4 - core index']
  #allocation1 [shape = 'u32[72,128]{1,0:T(1,128)}', space=vmem, size = 0x9000, scoped, tag = 'internal scratch']
  %s0 = inlined_call_operand.vmem [shape: f32[2,1,32], index: 0, kind: input, shape index: {}]
  %s1 = inlined_call_operand.vmem [shape: f32[2,1,32], index: 1, kind: input, shape index: {}]
  %s2 = inlined_call_operand.vmem [shape: f32[2,8,32], index: 2, kind: input, shape index: {}]
  %s3 = inlined_call_operand.vmem [shape: f32[32,16], index: 3, kind: input, shape index: {}]
  %s4 = inlined_call_operand.vmem [shape: f32[1,16], index: 4, kind: input, shape index: {}]
  %s5 = inlined_call_operand.hbm [shape: f32[2,8,16], index: 5, kind: output, shape index: {}]
  %s6 = sld [smem:[#allocation0]]
  $region53: #{tpu_custom_call.1} parent=0
    _
  %s8 = ssub.s32 1, %s6
  %s9 = scalar_select 0, %s8, %s6
  $region1: #{tpu_custom_call.1} parent=0
    #allocation2 [shape = 'u8[8192]{0}', space=vmem, size = 0x2000, scoped, tag = 'output window, operand 0']
    #allocation3 [shape = 's32[2]{0}', space=sflag, size = 0x8, scoped, tag = 'scoped memory for tpu_custom_call.1']
    %10 = vsyncpa [#allocation3], 0
    %s11 = scalar_lea.sflag [#allocation3], 1
    %12 = vsyncpa %s11, 0
    loop: start=0, step=1, limit=4
    $region2: #{tpu_custom_call.1} parent=1 // loop_pre_header
      _
    $region3: #{tpu_custom_call.1} parent=1 // loop_header
      %s14 = sphi 0, %s18
      %p15 = scmp.ge.s32.totalorder %s14, 4
      %s21 = sphi 0, %s33
      %s22 = sphi 0, %s29
      %s23 = sphi 0, %s21
      %s24 = sphi 0, %s22
      %s25 = sphi 0, %s23
      %s26 = sphi 0, %s24
      %s36 = sphi 0, %s38
      %s39 = sphi 0, %s36
      %s40 = sphi 0, %s39
      %s56 = sphi 0, %s40
      %s62 = sphi 0, %s64
      %s65 = sphi 0, %s62
      %s66 = sphi 0, %s65
      %s82 = sphi 0, %s66
      %s90 = sphi 0, %s92
      %s93 = sphi 0, %s90
      %s94 = sphi 0, %s93
      %s110 = sphi 0, %s94
      %s114 = sphi 0, %s114
      %s116 = sphi 0, %s114
      %s117 = sphi 0, %s116
      %s131 = sphi 0, %s117
      %s135 = sphi 0, %s135
      %s137 = sphi 0, %s135
      %s138 = sphi 0, %s137
      %s152 = sphi 0, %s138
      %s160 = sphi 0, %s162
      %s163 = sphi 0, %s160
      %s164 = sphi 0, %s163
      %s180 = sphi 0, %s164
    $region4: #{tpu_custom_call.1} parent=1 // loop_header_branch
      %17 = sbr.rel (%p15) target = $region8
    $region5: #{tpu_custom_call.1} parent=1 // loop_body
      %s19 = ssub.s32 %s14, 1
      %s20 = ssub.s32 %s14, 2
      %s27 = sadd.s32 1, %s22
      %p28 = scmp.ge.s32.totalorder %s27, 1
      %s29 = scalar_select %p28, 0, %s27
      %s30 = sadd.s32 1, %s21
      %s31 = scalar_select %p28, %s30, %s21
      %p32 = scmp.ge.s32.totalorder %s31, 2
      %s33 = scalar_select %p32, 0, %s31
      %s34 = ssub.s32 %s21, %s33
      %p35 = scmp.eq.s32.totalorder %s34, 0
      %s37 = sadd.s32 %s36, 1
      %s38 = scalar_select %p35, %s36, %s37
      %p41 = pneg %p35
      %p42 = scmp.eq.s32.totalorder %s14, 1
      %p43 = por %p41, %p42
      %p44 = scmp.ne.s32.totalorder %s36, %s39
      %p45 = scmp.eq.s32.totalorder %s14, 0
      %p46 = por %p44, %p45
      %p47 = scmp.ne.s32.totalorder %s36, %s39
      %p48 = scmp.eq.s32.totalorder %s19, 1
      %p49 = por %p47, %p48
      %p50 = scmp.ne.s32.totalorder %s39, %s40
      %p51 = scmp.eq.s32.totalorder %s19, 0
      %p52 = por %p50, %p51
      %p53 = scmp.ne.s32.totalorder %s39, %s40
      %p54 = scmp.eq.s32.totalorder %s20, 1
      %p55 = por %p53, %p54
      %p57 = scmp.ne.s32.totalorder %s40, %s56
      %p58 = scmp.eq.s32.totalorder %s20, 0
      %p59 = por %p57, %p58
      %s60 = ssub.s32 %s21, %s33
      %p61 = scmp.eq.s32.totalorder %s60, 0
      %s63 = sadd.s32 %s62, 1
      %s64 = scalar_select %p61, %s62, %s63
      %p67 = pneg %p61
      %p68 = scmp.eq.s32.totalorder %s14, 1
      %p69 = por %p67, %p68
      %p70 = scmp.ne.s32.totalorder %s62, %s65
      %p71 = scmp.eq.s32.totalorder %s14, 0
      %p72 = por %p70, %p71
      %p73 = scmp.ne.s32.totalorder %s62, %s65
      %p74 = scmp.eq.s32.totalorder %s19, 1
      %p75 = por %p73, %p74
      %p76 = scmp.ne.s32.totalorder %s65, %s66
      %p77 = scmp.eq.s32.totalorder %s19, 0
      %p78 = por %p76, %p77
      %p79 = scmp.ne.s32.totalorder %s65, %s66
      %p80 = scmp.eq.s32.totalorder %s20, 1
      %p81 = por %p79, %p80
      %p83 = scmp.ne.s32.totalorder %s66, %s82
      %p84 = scmp.eq.s32.totalorder %s20, 0
      %p85 = por %p83, %p84
      %s86 = ssub.s32 %s21, %s33
      %s87 = ssub.s32 %s22, %s29
      %s88 = sor.u32 %s86, %s87
      %p89 = scmp.eq.s32.totalorder %s88, 0
      %s91 = sadd.s32 %s90, 1
      %s92 = scalar_select %p89, %s90, %s91
      %p95 = pneg %p89
      %p96 = scmp.eq.s32.totalorder %s14, 1
      %p97 = por %p95, %p96
      %p98 = scmp.ne.s32.totalorder %s90, %s93
      %p99 = scmp.eq.s32.totalorder %s14, 0
      %p100 = por %p98, %p99
      %p101 = scmp.ne.s32.totalorder %s90, %s93
      %p102 = scmp.eq.s32.totalorder %s19, 1
      %p103 = por %p101, %p102
      %p104 = scmp.ne.s32.totalorder %s93, %s94
      %p105 = scmp.eq.s32.totalorder %s19, 0
      %p106 = por %p104, %p105
      %p107 = scmp.ne.s32.totalorder %s93, %s94
      %p108 = scmp.eq.s32.totalorder %s20, 1
      %p109 = por %p107, %p108
      %p111 = scmp.ne.s32.totalorder %s94, %s110
      %p112 = scmp.eq.s32.totalorder %s20, 0
      %p113 = por %p111, %p112
      %s115 = sadd.s32 %s114, 1
      %p118 = scmp.eq.s32.totalorder %s14, 1
      %p119 = scmp.ne.s32.totalorder %s114, %s116
      %p120 = scmp.eq.s32.totalorder %s14, 0
      %p121 = por %p119, %p120
      %p122 = scmp.ne.s32.totalorder %s114, %s116
      %p123 = scmp.eq.s32.totalorder %s19, 1
      %p124 = por %p122, %p123
      %p125 = scmp.ne.s32.totalorder %s116, %s117
      %p126 = scmp.eq.s32.totalorder %s19, 0
      %p127 = por %p125, %p126
      %p128 = scmp.ne.s32.totalorder %s116, %s117
      %p129 = scmp.eq.s32.totalorder %s20, 1
      %p130 = por %p128, %p129
      %p132 = scmp.ne.s32.totalorder %s117, %s131
      %p133 = scmp.eq.s32.totalorder %s20, 0
      %p134 = por %p132, %p133
      %s136 = sadd.s32 %s135, 1
      %p139 = scmp.eq.s32.totalorder %s14, 1
      %p140 = scmp.ne.s32.totalorder %s135, %s137
      %p141 = scmp.eq.s32.totalorder %s14, 0
      %p142 = por %p140, %p141
      %p143 = scmp.ne.s32.totalorder %s135, %s137
      %p144 = scmp.eq.s32.totalorder %s19, 1
      %p145 = por %p143, %p144
      %p146 = scmp.ne.s32.totalorder %s137, %s138
      %p147 = scmp.eq.s32.totalorder %s19, 0
      %p148 = por %p146, %p147
      %p149 = scmp.ne.s32.totalorder %s137, %s138
      %p150 = scmp.eq.s32.totalorder %s20, 1
      %p151 = por %p149, %p150
      %p153 = scmp.ne.s32.totalorder %s138, %s152
      %p154 = scmp.eq.s32.totalorder %s20, 0
      %p155 = por %p153, %p154
      %s156 = ssub.s32 %s21, %s33
      %s157 = ssub.s32 %s22, %s29
      %s158 = sor.u32 %s156, %s157
      %p159 = scmp.eq.s32.totalorder %s158, 0
      %s161 = sadd.s32 %s160, 1
      %s162 = scalar_select %p159, %s160, %s161
      %p165 = pneg %p159
      %p166 = scmp.eq.s32.totalorder %s14, 1
      %p167 = por %p165, %p166
      %p168 = scmp.ne.s32.totalorder %s160, %s163
      %p169 = scmp.eq.s32.totalorder %s14, 0
      %p170 = por %p168, %p169
      %p171 = scmp.ne.s32.totalorder %s160, %s163
      %p172 = scmp.eq.s32.totalorder %s19, 1
      %p173 = por %p171, %p172
      %p174 = scmp.ne.s32.totalorder %s163, %s164
      %p175 = scmp.eq.s32.totalorder %s19, 0
      %p176 = por %p174, %p175
      %p177 = scmp.ne.s32.totalorder %s163, %s164
      %p178 = scmp.eq.s32.totalorder %s20, 1
      %p179 = por %p177, %p178
      %p181 = scmp.ne.s32.totalorder %s164, %s180
      %p182 = scmp.eq.s32.totalorder %s20, 0
      %p183 = por %p181, %p182
      %p184 = scmp.le.s32.totalorder 1, %s14
      %p185 = scmp.lt.s32.totalorder %s14, 3
      %p186 = pnand %p184, %p185
      %p187 = pneg %p186
      // Predicated region
      $region9: #{tpu_custom_call.1} parent=5 // pred_check
        _
      $region10: #{tpu_custom_call.1} parent=5 // pred_check_branch
        %189 = sbr.rel (%p186) target = $region12
      $region11: #{tpu_custom_call.1} parent=5 // pred_region
        %s190 = ssub.s32 %s14, 1
        // Predicated region
        $region13: #{tpu_custom_call.1} parent=11 // pred_check
          %p191 = pneg %p127
        $region14: #{tpu_custom_call.1} parent=11 // pred_check_branch
          %193 = sbr.rel (%p191) target = $region16
        $region15: #{tpu_custom_call.1} parent=11 // pred_region
          _
        $region16: #{tpu_custom_call.1} parent=11 // pred_fallthru
          _
        // Predicated region
        $region17: #{tpu_custom_call.1} parent=11 // pred_check
          %p194 = pneg %p148
        $region18: #{tpu_custom_call.1} parent=11 // pred_check_branch
          %196 = sbr.rel (%p194) target = $region20
        $region19: #{tpu_custom_call.1} parent=11 // pred_region
          _
        $region20: #{tpu_custom_call.1} parent=11 // pred_fallthru
          _
      $region12: #{tpu_custom_call.1} parent=5 // pred_fallthru
        _
      %p197 = scmp.lt.s32.totalorder %s14, 2
      // Predicated region
      $region21: #{tpu_custom_call.1} parent=5 // pred_check
        %p198 = pneg %p197
      $region22: #{tpu_custom_call.1} parent=5 // pred_check_branch
        %200 = sbr.rel (%p198) target = $region24
      $region23: #{tpu_custom_call.1} parent=5 // pred_region
        // Predicated region
        $region25: #{tpu_custom_call.1} parent=23 // pred_check
          %p201 = pneg %p46
        $region26: #{tpu_custom_call.1} parent=23 // pred_check_branch
          %203 = sbr.rel (%p201) target = $region28
        $region27: #{tpu_custom_call.1} parent=23 // pred_region
          %p204 = scmp.lt.s32.totalorder %s21, 1
          %s205 = scalar_select %p204, %s21, 1
          %s206 = scalar_lea.vmem %s0, %s205
        $region28: #{tpu_custom_call.1} parent=23 // pred_fallthru
          _
        // Predicated region
        $region29: #{tpu_custom_call.1} parent=23 // pred_check
          %p207 = pneg %p72
        $region30: #{tpu_custom_call.1} parent=23 // pred_check_branch
          %209 = sbr.rel (%p207) target = $region32
        $region31: #{tpu_custom_call.1} parent=23 // pred_region
          %p210 = scmp.lt.s32.totalorder %s21, 1
          %s211 = scalar_select %p210, %s21, 1
          %s212 = scalar_lea.vmem %s1, %s211
        $region32: #{tpu_custom_call.1} parent=23 // pred_fallthru
          _
        // Predicated region
        $region33: #{tpu_custom_call.1} parent=23 // pred_check
          %p213 = pneg %p100
        $region34: #{tpu_custom_call.1} parent=23 // pred_check_branch
          %215 = sbr.rel (%p213) target = $region36
        $region35: #{tpu_custom_call.1} parent=23 // pred_region
          %p216 = scmp.lt.s32.totalorder %s21, 1
          %s217 = scalar_select %p216, %s21, 1
          %p218 = scmp.lt.s32.totalorder %s22, 0
          %s219 = scalar_select %p218, %s22, 0
          %s220 = sadd.s32 %s219, %s217
          %s221 = smul.addr %s220, 8
          %s222 = scalar_lea.vmem %s2, %s221
        $region36: #{tpu_custom_call.1} parent=23 // pred_fallthru
          _
      $region24: #{tpu_custom_call.1} parent=5 // pred_fallthru
        _
      %p223 = scmp.le.s32.totalorder 1, %s14
      %p224 = scmp.lt.s32.totalorder %s14, 3
      %p225 = pnand %p223, %p224
      %p226 = pneg %p225
      // Predicated region
      $region37: #{tpu_custom_call.1} parent=5 // pred_check
        _
      $region38: #{tpu_custom_call.1} parent=5 // pred_check_branch
        %228 = sbr.rel (%p225) target = $region40
      $region39: #{tpu_custom_call.1} parent=5 // pred_region
        %s229 = ssub.s32 %s14, 1
        %p230 = scmp.lt.s32.totalorder %s23, 1
        %s231 = scalar_select %p230, %s23, 1
        %s232 = scalar_lea.vmem %s0, %s231
        %p233 = pneg %p52
        %p234 = pneg %p49
        %p235 = scmp.lt.s32.totalorder %s23, 1
        %s236 = scalar_select %p235, %s23, 1
        %s237 = scalar_lea.vmem %s1, %s236
        %p238 = pneg %p78
        %p239 = pneg %p75
        %p240 = scmp.lt.s32.totalorder %s23, 1
        %s241 = scalar_select %p240, %s23, 1
        %p242 = scmp.lt.s32.totalorder %s24, 0
        %s243 = scalar_select %p242, %s24, 0
        %s244 = sadd.s32 %s243, %s241
        %s245 = smul.addr %s244, 8
        %s246 = scalar_lea.vmem %s2, %s245
        %p247 = pneg %p106
        %p248 = pneg %p103
        %p249 = pneg %p127
        %p250 = pneg %p124
        %p251 = pneg %p148
        %p252 = pneg %p145
        %p253 = pneg %p176
        %p254 = pneg %p173
        %s255 = sand.u32 %s163, 1
        %s256 = scalar_lea.sflag [#allocation3], %s255
        %s257 = sand.u32 %s163, 1
        %s258 = smul.addr %s257, 8
        %s259 = scalar_lea.vmem [#allocation2], %s258
        %p260 = scmp.lt.s32.totalorder %s23, 1
        %s261 = scalar_select %p260, %s23, 1
        %s262 = scalar_lea.vmem %s0, %s261
        %p263 = scmp.lt.s32.totalorder %s23, 1
        %s264 = scalar_select %p263, %s23, 1
        %s265 = scalar_lea.vmem %s1, %s264
        %p266 = scmp.lt.s32.totalorder %s23, 1
        %s267 = scalar_select %p266, %s23, 1
        %p268 = scmp.lt.s32.totalorder %s24, 0
        %s269 = scalar_select %p268, %s24, 0
        %s270 = sadd.s32 %s269, %s267
        %s271 = smul.addr %s270, 8
        %s272 = scalar_lea.vmem %s2, %s271
        %v273 = vld [vmem:[%s272] sm:$0xff]
        %vm274 = vcmask 261120
        %v275 = vsel %vm274, %v273, 0.0
        %276 = vadd.xlane.f32.xlu0 %v275
        %v277 = vpop.xlane.xlu0 %276
        %v278 = vrcp.pop 32.0
        %v279 = vmul.f32 32.0, %v278
        %v280 = vsub.f32 1.0, %v279
        %v281 = vmul.f32 %v278, %v280
        %v282 = vadd.f32 %v278, %v281
        %vm283 = vweird.f32 %v278
        %v284 = vsel %vm283, %v278, %v282
        %v285 = vmul.f32 %v277, %v284
        %v286 = vmul.f32 %v273, %v273
        %v287 = vsel %vm274, %v286, 0.0
        %288 = vadd.xlane.f32.xlu0 %v287
        %v289 = vpop.xlane.xlu0 %288
        %v290 = vmul.f32 %v289, %v284
        %v291 = vmul.f32 %v285, %v285
        %v292 = vsub.f32 %v290, %v291
        %v293 = vmax.f32 %v292, 0.0
        %v294 = vadd.f32 %v293, 1e-06
        %v295 = vrsqrt.pop %v294
        %v296 = vmul.f32 %v295, %v294
        %v297 = vmul.f32 %v296, %v295
        %v298 = vmul.f32 0.5, %v297
        %v299 = vsub.f32 1.5, %v298
        %v300 = vmul.f32 %v295, %v299
        %vm301 = vweird.f32 %v294
        %vm302 = vweird.f32 %v295
        %vm303 = vmor %vm301, %vm302
        %v304 = vsel %vm303, %v295, %v300
        %v305 = vld [vmem:[%s265] sm:$0x1]
        %v306 = vld [vmem:[%s262] sm:$0x1]
        %v307 = vadd.f32 %v305, 1.0
        %v309 = vperm.slane %v307, 0
        %v311 = vmul.f32 %v304, %v309
        %v312 = vmul.f32 %v285, %v311
        %v314 = vperm.slane %v306, 0
        %v316 = vsub.f32 %v314, %v312
        %v317 = vmul.f32 %v273, %v311
        %v318 = vadd.f32 %v317, %v316
        %v319 = vld [vmem:[%s3] sm:$0xff]
        %v320 = vld [vmem:[%s3 + $0x8] sm:$0xff]
        %v321 = vld [vmem:[%s3 + $0x10] sm:$0xff]
        %v322 = vld [vmem:[%s3 + $0x18] sm:$0xff]
        %v323 = vld [vmem:[%s4] sm:$0x1]
        %v325 = vperm.slane %v323, 0
        %v328 = vsel %vm274, %v318, 0
        %330 = vmatpush.msra.mxu0 0.0
        %331 = vmatpush.msra.mxu0 0.0
        %332 = vmatpush.msra.mxu0 0.0
        %333 = vmatpush.msra.mxu0 0.0
        %334 = vmatpush.msra.mxu0 0.0
        %335 = vmatpush.msra.mxu0 0.0
        %336 = vmatpush.msra.mxu0 0.0
        %337 = vmatpush.msra.mxu0 0.0
        %338 = vmatpush.msra.mxu0 0.0
        %339 = vmatpush.msra.mxu0 0.0
        %340 = vmatpush.msra.mxu0 0.0
        %341 = vmatpush.msra.mxu0 0.0
        %342 = vmatpush.msra.mxu0 %v322
        %343 = vmatpush.msra.mxu0 %v321
        %344 = vmatpush.msra.mxu0 %v320
        %345 = vmatpush.msra.mxu0 %v319
        %346 = vmatmul.f32.gmra.mxu0 %v328
        %v347 = vpop.f32.mrf.mxu0
        %v348 = vadd.f32 %v325, %v347
        %349 = vdwg.mxu0
        %vm350 = vcmask 130048
        %351 = vst.msk [vmem:[%s259] sm:$0xff] %vm350, %v348
        %s352 = sand.u32 %s163, 1
        %s353 = scalar_lea.sflag [#allocation3], %s352
        %s354 = sand.u32 %s163, 1
        %s355 = smul.addr %s354, 8
        %s356 = scalar_lea.vmem [#allocation2], %s355
        // Predicated region
        $region41: #{tpu_custom_call.1} parent=39 // pred_check
          %p357 = pneg %p173
        $region42: #{tpu_custom_call.1} parent=39 // pred_check_branch
          %359 = sbr.rel (%p357) target = $region44
        $region43: #{tpu_custom_call.1} parent=39 // pred_region
          %361 = vsyncadd %s353, 0
          %s362 = sadd.s32 %s24, %s23
          %s363 = smul.addr %s362, 8
          %s364 = scalar_lea.hbm %s5, %s363
          %s366 = sshll.u32 %s356, 4
          %s367 = int_to_ptr.vmem [resolvable:$true] %s366
          %s368 = sshll.u32 %s364, 4
          %s369 = int_to_ptr.hbm [resolvable:$true] %s368
          %371 = dma.vmem_to_hbm [thread:$0]  %s367, 128, %s369, %s353
        $region44: #{tpu_custom_call.1} parent=39 // pred_fallthru
          _
      $region40: #{tpu_custom_call.1} parent=5 // pred_fallthru
        _
      %p372 = scmp.le.s32.totalorder 2, %s14
      // Predicated region
      $region45: #{tpu_custom_call.1} parent=5 // pred_check
        %p373 = pneg %p372
      $region46: #{tpu_custom_call.1} parent=5 // pred_check_branch
        %375 = sbr.rel (%p373) target = $region48
      $region47: #{tpu_custom_call.1} parent=5 // pred_region
        %s376 = ssub.s32 %s14, 2
        // Predicated region
        $region49: #{tpu_custom_call.1} parent=47 // pred_check
          %p377 = pneg %p179
        $region50: #{tpu_custom_call.1} parent=47 // pred_check_branch
          %379 = sbr.rel (%p377) target = $region52
        $region51: #{tpu_custom_call.1} parent=47 // pred_region
          %s380 = sand.u32 %s164, 1
          %s381 = scalar_lea.sflag [#allocation3], %s380
          %s382 = sand.u32 %s164, 1
          %s383 = smul.addr %s382, 8
          %s384 = scalar_lea.vmem [#allocation2], %s383
          %386 = dma.done %s381, 128
        $region52: #{tpu_custom_call.1} parent=47 // pred_fallthru
          _
      $region48: #{tpu_custom_call.1} parent=5 // pred_fallthru
        _
    $region6: #{tpu_custom_call.1} parent=1 // loop_footer
      %s18 = sadd.s32 1, %s14
    $region7: #{tpu_custom_call.1} parent=1 // loop_footer_branch
      %13 = sbr.rel target = $region3
    $region8: #{tpu_custom_call.1} parent=1 // loop_exit
      _
    %387 = vsyncpa [#allocation3], 1
    %s388 = scalar_lea.sflag [#allocation3], 1
    %389 = vsyncpa %s388, 1

</llo_original>
